<compile_context>
chip_gen: v7x
topology: tpu7x:2x2x1
jax: 0.10.0
libtpu: 0.0.40
codegen_flags: <defaults>
</compile_context>

<pallas_src>
import functools

import jax
import jax.numpy as jnp
from jax.experimental import pallas as pl
from jax.experimental.pallas import tpu as pltpu

INPUT_SIZE = 5
HIDDEN = 128
OUTPUT_SIZE = 5
MAX_TB = 1024       # max batch-tile rows (multiple of 8)


def _mlp_kernel(x_ref, w1, b1, w2, b2, w3, b3, w4, b4, o_ref):
    """Fused 4-layer MLP on one (tb, INPUT_SIZE) batch tile.

    Weights may be f32 or bf16; MXU accumulation is always f32 and the f32
    biases are added post-accumulation.  Every op is row-independent, which
    is what makes the unpadded / partial-last-block batch handling safe.
    """
    cd = w1.dtype  # MXU input dtype (f32 or bf16)
    h = jnp.dot(x_ref[...].astype(cd), w1[...],
                preferred_element_type=jnp.float32) + b1[...]
    h = jnp.maximum(h, 0.0)
    h = jnp.dot(h.astype(cd), w2[...],
                preferred_element_type=jnp.float32) + b2[...]
    h = jnp.maximum(h, 0.0)
    h = jnp.dot(h.astype(cd), w3[...],
                preferred_element_type=jnp.float32) + b3[...]
    h = jnp.maximum(h, 0.0)
    o_ref[...] = (jnp.dot(h.astype(cd), w4[...],
                          preferred_element_type=jnp.float32)
                  + b4[...]).astype(o_ref.dtype)


@functools.partial(jax.jit, static_argnames=("max_tb", "core_parallel"))
def imitation_model_forward(x, params, *, max_tb=MAX_TB, core_parallel=False):
    """x: (B, INPUT_SIZE).  params: dict w1..w4 (f32 or bf16), b1..b4 (f32, (1,N))."""
    B = x.shape[0]
    if B <= max_tb:
        tb = B          # single grid step; block == full array dims (always legal)
    else:
        tb = max_tb     # multiple of 8; Pallas handles the partial last block
    n_steps = pl.cdiv(B, tb)

    # Weights/biases: whole-array, VMEM-resident (their block never changes,
    # so there is no per-step DMA and no double-buffering for them).
    resident = pl.BlockSpec(memory_space=pltpu.MemorySpace.VMEM)

    # CORE_PARALLEL shards the batch axis across TensorCores (v7x, >=2 steps);
    # plain "parallel" is the safe default on single-TC v5e/v6e.
    sem = pltpu.CORE_PARALLEL if core_parallel else "parallel"

    return pl.pallas_call(
        _mlp_kernel,
        out_shape=jax.ShapeDtypeStruct((B, OUTPUT_SIZE), jnp.float32),
        grid_spec=pltpu.PrefetchScalarGridSpec(
            num_scalar_prefetch=0,
            grid=(n_steps,),
            in_specs=[
                pl.BlockSpec((tb, INPUT_SIZE), lambda i: (i, 0)),  # x tile
                resident, resident,                                # layer 1
                resident, resident,                                # layer 2
                resident, resident,                                # layer 3
                resident, resident,                                # layer 4
            ],
            out_specs=pl.BlockSpec((tb, OUTPUT_SIZE), lambda i: (i, 0)),
        ),
        compiler_params=pltpu.CompilerParams(dimension_semantics=(sem,)),
    )(x.astype(jnp.float32),
      params["w1"], params["b1"], params["w2"], params["b2"],
      params["w3"], params["b3"], params["w4"], params["b4"])


def _init_linear(key, fan_in, fan_out):
    """PyTorch nn.Linear default init: U(-1/sqrt(fan_in), 1/sqrt(fan_in))."""
    kw, kb = jax.random.split(key)
    bound = 1.0 / jnp.sqrt(float(fan_in))
    w = jax.random.uniform(kw, (fan_in, fan_out), jnp.float32, -bound, bound)
    b = jax.random.uniform(kb, (fan_out,), jnp.float32, -bound, bound)
    return w, b


def init_params(key, weight_dtype=jnp.float32):
    k1, k2, k3, k4 = jax.random.split(key, 4)
    w1, b1 = _init_linear(k1, INPUT_SIZE, HIDDEN)
    w2, b2 = _init_linear(k2, HIDDEN, HIDDEN)
    w3, b3 = _init_linear(k3, HIDDEN, HIDDEN)
    w4, b4 = _init_linear(k4, HIDDEN, OUTPUT_SIZE)
    params = {
        "w1": w1.astype(weight_dtype), "b1": b1.reshape(1, -1),
        "w2": w2.astype(weight_dtype), "b2": b2.reshape(1, -1),
        "w3": w3.astype(weight_dtype), "b3": b3.reshape(1, -1),
        "w4": w4.astype(weight_dtype), "b4": b4.reshape(1, -1),
    }
    raw = [(w1, b1), (w2, b2), (w3, b3), (w4, b4)]
    return params, raw


def cast_weights(params, dtype):
    out = dict(params)
    for k in ("w1", "w2", "w3", "w4"):
        out[k] = params[k].astype(dtype)
    return out


def reference_forward(x, raw):
    """Pure-JAX reference at HIGHEST matmul precision (true-f32 on TPU)."""
    h = x
    for (w, b) in raw[:-1]:
        h = jnp.maximum(
            jnp.dot(h, w, precision=jax.lax.Precision.HIGHEST) + b, 0.0)
    w, b = raw[-1]
    return jnp.dot(h, w, precision=jax.lax.Precision.HIGHEST) + b


# TODO(synk): train()/save()/draw_loss() (optimizer loop, checkpointing,
# plotting) are host-side utilities, not part of the forward pass.

if __name__ == "__main__":
    key = jax.random.PRNGKey(0)
    kp, kx = jax.random.split(key)
    params_f32, raw = init_params(kp)

    # Small main run: batch 32 -> single grid step, block == full array.
    B = 32
    x = jax.random.normal(kx, (B, INPUT_SIZE), jnp.float32)
    out = jax.block_until_ready(imitation_model_forward(x, params_f32))
    ref = reference_forward(x, raw)
    assert out.shape == (B, OUTPUT_SIZE)
    assert jnp.allclose(out, ref, atol=1e-3, rtol=1e-3), "f32 path mismatch"

    # Ragged batch + multi-step grid with a partial last block (37 = 16+16+5).
    x2 = jax.random.normal(jax.random.PRNGKey(1), (37, INPUT_SIZE), jnp.float32)
    out2 = jax.block_until_ready(
        imitation_model_forward(x2, params_f32, max_tb=16))
    ref2 = reference_forward(x2, raw)
    assert out2.shape == (37, OUTPUT_SIZE)
    assert jnp.allclose(out2, ref2, atol=1e-3, rtol=1e-3), "ragged path mismatch"

    # bf16-weight path (native MXU dtype on every TPU generation), f32 accum.
    params_bf16 = cast_weights(params_f32, jnp.bfloat16)
    out_bf = jax.block_until_ready(imitation_model_forward(x, params_bf16))
    assert jnp.allclose(out_bf, ref, atol=1e-1, rtol=1e-1), "bf16 path mismatch"

    print("KERNEL_OK")
</pallas_src>

<mosaic_0001>
module attributes {stable_mosaic.version = 11 : i64} {
  func.func @_mlp_kernel(%arg0: i32, %arg1: memref<32x5xf32, #tpu.memory_space<vmem>>, %arg2: memref<5x128xf32, #tpu.memory_space<vmem>>, %arg3: memref<1x128xf32, #tpu.memory_space<vmem>>, %arg4: memref<128x128xf32, #tpu.memory_space<vmem>>, %arg5: memref<1x128xf32, #tpu.memory_space<vmem>>, %arg6: memref<128x128xf32, #tpu.memory_space<vmem>>, %arg7: memref<1x128xf32, #tpu.memory_space<vmem>>, %arg8: memref<128x5xf32, #tpu.memory_space<vmem>>, %arg9: memref<1x5xf32, #tpu.memory_space<vmem>>, %arg10: memref<32x5xf32, #tpu.memory_space<vmem>>) attributes {dimension_semantics = [#tpu.dimension_semantics<parallel>], iteration_bounds = array<i64: 1>, scalar_prefetch = 0 : i64, scratch_operands = 0 : i64, tpu.core_type = #tpu.core_type<tc>, window_params = [{transform_indices = @transform_0, window_bounds = array<i64: 32, 5>}, {pipeline_mode = #tpu.pipeline_mode<synchronous>, transform_indices = @transform_1, window_bounds = array<i64: 5, 128>}, {pipeline_mode = #tpu.pipeline_mode<synchronous>, transform_indices = @transform_2, window_bounds = array<i64: 1, 128>}, {pipeline_mode = #tpu.pipeline_mode<synchronous>, transform_indices = @transform_3, window_bounds = array<i64: 128, 128>}, {pipeline_mode = #tpu.pipeline_mode<synchronous>, transform_indices = @transform_4, window_bounds = array<i64: 1, 128>}, {pipeline_mode = #tpu.pipeline_mode<synchronous>, transform_indices = @transform_5, window_bounds = array<i64: 128, 128>}, {pipeline_mode = #tpu.pipeline_mode<synchronous>, transform_indices = @transform_6, window_bounds = array<i64: 1, 128>}, {pipeline_mode = #tpu.pipeline_mode<synchronous>, transform_indices = @transform_7, window_bounds = array<i64: 128, 5>}, {pipeline_mode = #tpu.pipeline_mode<synchronous>, transform_indices = @transform_8, window_bounds = array<i64: 1, 5>}, {transform_indices = @transform_9, window_bounds = array<i64: 32, 5>}]} {
    %c0 = arith.constant 0 : index
    %c0_0 = arith.constant 0 : index
    %0 = vector.load %arg1[%c0, %c0_0] : memref<32x5xf32, #tpu.memory_space<vmem>>, vector<32x5xf32>
    %c0_1 = arith.constant 0 : index
    %c0_2 = arith.constant 0 : index
    %1 = vector.load %arg2[%c0_1, %c0_2] : memref<5x128xf32, #tpu.memory_space<vmem>>, vector<5x128xf32>
    %cst = arith.constant dense<0.000000e+00> : vector<32x128xf32>
    %2 = tpu.matmul %0, %1, %cst {dimension_numbers = #tpu.dot_dimension_numbers<[1], [0], [0], [1], [0, 0, 1, 1], [], []>} : vector<32x5xf32>, vector<5x128xf32>, vector<32x128xf32> -> vector<32x128xf32>
    %c0_3 = arith.constant 0 : index
    %c0_4 = arith.constant 0 : index
    %3 = vector.load %arg3[%c0_3, %c0_4] : memref<1x128xf32, #tpu.memory_space<vmem>>, vector<1x128xf32>
    %4 = vector.broadcast %3 : vector<1x128xf32> to vector<32x128xf32>
    %5 = arith.addf %2, %4 : vector<32x128xf32>
    %cst_5 = arith.constant 0.000000e+00 : f32
    %6 = vector.broadcast %cst_5 : f32 to vector<32x128xf32>
    %7 = arith.maximumf %5, %6 : vector<32x128xf32>
    %c0_6 = arith.constant 0 : index
    %c0_7 = arith.constant 0 : index
    %8 = vector.load %arg4[%c0_6, %c0_7] : memref<128x128xf32, #tpu.memory_space<vmem>>, vector<128x128xf32>
    %cst_8 = arith.constant dense<0.000000e+00> : vector<32x128xf32>
    %9 = tpu.matmul %7, %8, %cst_8 {dimension_numbers = #tpu.dot_dimension_numbers<[1], [0], [0], [1], [0, 0, 1, 1], [], []>} : vector<32x128xf32>, vector<128x128xf32>, vector<32x128xf32> -> vector<32x128xf32>
    %c0_9 = arith.constant 0 : index
    %c0_10 = arith.constant 0 : index
    %10 = vector.load %arg5[%c0_9, %c0_10] : memref<1x128xf32, #tpu.memory_space<vmem>>, vector<1x128xf32>
    %11 = vector.broadcast %10 : vector<1x128xf32> to vector<32x128xf32>
    %12 = arith.addf %9, %11 : vector<32x128xf32>
    %cst_11 = arith.constant 0.000000e+00 : f32
    %13 = vector.broadcast %cst_11 : f32 to vector<32x128xf32>
    %14 = arith.maximumf %12, %13 : vector<32x128xf32>
    %c0_12 = arith.constant 0 : index
    %c0_13 = arith.constant 0 : index
    %15 = vector.load %arg6[%c0_12, %c0_13] : memref<128x128xf32, #tpu.memory_space<vmem>>, vector<128x128xf32>
    %cst_14 = arith.constant dense<0.000000e+00> : vector<32x128xf32>
    %16 = tpu.matmul %14, %15, %cst_14 {dimension_numbers = #tpu.dot_dimension_numbers<[1], [0], [0], [1], [0, 0, 1, 1], [], []>} : vector<32x128xf32>, vector<128x128xf32>, vector<32x128xf32> -> vector<32x128xf32>
    %c0_15 = arith.constant 0 : index
    %c0_16 = arith.constant 0 : index
    %17 = vector.load %arg7[%c0_15, %c0_16] : memref<1x128xf32, #tpu.memory_space<vmem>>, vector<1x128xf32>
    %18 = vector.broadcast %17 : vector<1x128xf32> to vector<32x128xf32>
    %19 = arith.addf %16, %18 : vector<32x128xf32>
    %cst_17 = arith.constant 0.000000e+00 : f32
    %20 = vector.broadcast %cst_17 : f32 to vector<32x128xf32>
    %21 = arith.maximumf %19, %20 : vector<32x128xf32>
    %c0_18 = arith.constant 0 : index
    %c0_19 = arith.constant 0 : index
    %22 = vector.load %arg8[%c0_18, %c0_19] : memref<128x5xf32, #tpu.memory_space<vmem>>, vector<128x5xf32>
    %cst_20 = arith.constant dense<0.000000e+00> : vector<32x5xf32>
    %23 = tpu.matmul %21, %22, %cst_20 {dimension_numbers = #tpu.dot_dimension_numbers<[1], [0], [0], [1], [0, 0, 1, 1], [], []>} : vector<32x128xf32>, vector<128x5xf32>, vector<32x5xf32> -> vector<32x5xf32>
    %c0_21 = arith.constant 0 : index
    %c0_22 = arith.constant 0 : index
    %24 = vector.load %arg9[%c0_21, %c0_22] : memref<1x5xf32, #tpu.memory_space<vmem>>, vector<1x5xf32>
    %25 = vector.broadcast %24 : vector<1x5xf32> to vector<32x5xf32>
    %26 = arith.addf %23, %25 : vector<32x5xf32>
    %c0_23 = arith.constant 0 : index
    %c0_24 = arith.constant 0 : index
    %27 = vector.load %arg10[%c0_23, %c0_24] : memref<32x5xf32, #tpu.memory_space<vmem>>, vector<32x5xf32>
    tpu.vector_store %arg10[%c0_23, %c0_24], %26 {strides = array<i32>} : memref<32x5xf32, #tpu.memory_space<vmem>>, vector<32x5xf32>,
    return
  }
  func.func @transform_0(%arg0: i32) -> (i32, i32) {
    %c0_i32 = arith.constant 0 : i32
    %c0_i32_0 = arith.constant 0 : i32
    return %arg0, %c0_i32 : i32, i32
  }
  func.func @transform_1(%arg0: i32) -> (i32, i32) {
    %c0_i32 = arith.constant 0 : i32
    %c0_i32_0 = arith.constant 0 : i32
    %c0_i32_1 = arith.constant 0 : i32
    return %c0_i32, %c0_i32_0 : i32, i32
  }
  func.func @transform_2(%arg0: i32) -> (i32, i32) {
    %c0_i32 = arith.constant 0 : i32
    %c0_i32_0 = arith.constant 0 : i32
    %c0_i32_1 = arith.constant 0 : i32
    return %c0_i32, %c0_i32_0 : i32, i32
  }
  func.func @transform_3(%arg0: i32) -> (i32, i32) {
    %c0_i32 = arith.constant 0 : i32
    %c0_i32_0 = arith.constant 0 : i32
    %c0_i32_1 = arith.constant 0 : i32
    return %c0_i32, %c0_i32_0 : i32, i32
  }
  func.func @transform_4(%arg0: i32) -> (i32, i32) {
    %c0_i32 = arith.constant 0 : i32
    %c0_i32_0 = arith.constant 0 : i32
    %c0_i32_1 = arith.constant 0 : i32
    return %c0_i32, %c0_i32_0 : i32, i32
  }
  func.func @transform_5(%arg0: i32) -> (i32, i32) {
    %c0_i32 = arith.constant 0 : i32
    %c0_i32_0 = arith.constant 0 : i32
    %c0_i32_1 = arith.constant 0 : i32
    return %c0_i32, %c0_i32_0 : i32, i32
  }
  func.func @transform_6(%arg0: i32) -> (i32, i32) {
    %c0_i32 = arith.constant 0 : i32
    %c0_i32_0 = arith.constant 0 : i32
    %c0_i32_1 = arith.constant 0 : i32
    return %c0_i32, %c0_i32_0 : i32, i32
  }
  func.func @transform_7(%arg0: i32) -> (i32, i32) {
    %c0_i32 = arith.constant 0 : i32
    %c0_i32_0 = arith.constant 0 : i32
    %c0_i32_1 = arith.constant 0 : i32
    return %c0_i32, %c0_i32_0 : i32, i32
  }
  func.func @transform_8(%arg0: i32) -> (i32, i32) {
    %c0_i32 = arith.constant 0 : i32
    %c0_i32_0 = arith.constant 0 : i32
    %c0_i32_1 = arith.constant 0 : i32
    return %c0_i32, %c0_i32_0 : i32, i32
  }
  func.func @transform_9(%arg0: i32) -> (i32, i32) {
    %c0_i32 = arith.constant 0 : i32
    %c0_i32_0 = arith.constant 0 : i32
    return %arg0, %c0_i32 : i32, i32
  }
}

</mosaic_0001>

<llo_original>
// kernel: imitation_model_forward.1
$region0: #{imitation_model_forward.1}
  #allocation0 [shape = 'u32[]', space=smem, size = 0x4, offset = 0x4, fixed_abs, tag = 'smem constant byte address 0x4 - core index']
  #allocation1 [shape = 'u32[144,128]{1,0:T(1,128)}', space=vmem, size = 0x12000, scoped, tag = 'internal scratch']
  %s0 = inlined_call_operand.vmem [shape: f32[32,5], index: 0, kind: input, shape index: {}]
  %s1 = inlined_call_operand.vmem [shape: f32[5,128], index: 1, kind: input, shape index: {}]
  %s2 = inlined_call_operand.vmem [shape: f32[1,128], index: 2, kind: input, shape index: {}]
  %s3 = inlined_call_operand.vmem [shape: f32[128,128], index: 3, kind: input, shape index: {}]
  %s4 = inlined_call_operand.vmem [shape: f32[1,128], index: 4, kind: input, shape index: {}]
  %s5 = inlined_call_operand.hbm [shape: f32[128,128], index: 5, kind: input, shape index: {}]
  %s6 = inlined_call_operand.vmem [shape: f32[1,128], index: 6, kind: input, shape index: {}]
  %s7 = inlined_call_operand.vmem [shape: f32[128,5], index: 7, kind: input, shape index: {}]
  %s8 = inlined_call_operand.vmem [shape: f32[1,5], index: 8, kind: input, shape index: {}]
  %s9 = inlined_call_operand.vmem [shape: f32[32,5], index: 9, kind: output, shape index: {}]
  %s10 = sld [smem:[#allocation0]]
  $region50: #{imitation_model_forward.1} parent=0
    _
  %s12 = ssub.s32 1, %s10
  %s13 = scalar_select 0, %s12, %s10
  $region1: #{imitation_model_forward.1} parent=0
    #allocation2 [shape = 'u8[65536]{0}', space=vmem, size = 0x10000, scoped, tag = 'input window, operand 5, single buffered']
    #allocation3 [shape = 's32[1]{0}', space=sflag, size = 0x4, scoped, tag = 'scoped memory for imitation_model_forward.1']
    %14 = vsyncpa [#allocation3], 0
    // Predicated region
    $region2: #{imitation_model_forward.1} parent=1 // pred_check
      _
    $region3: #{imitation_model_forward.1} parent=1 // pred_check_branch
      %16 = sbr.rel (0) target = $region5
    $region4: #{imitation_model_forward.1} parent=1 // pred_region
      _
    $region5: #{imitation_model_forward.1} parent=1 // pred_fallthru
      _
    // Predicated region
    $region6: #{imitation_model_forward.1} parent=1 // pred_check
      _
    $region7: #{imitation_model_forward.1} parent=1 // pred_check_branch
      %18 = sbr.rel (0) target = $region9
    $region8: #{imitation_model_forward.1} parent=1 // pred_region
      _
    $region9: #{imitation_model_forward.1} parent=1 // pred_fallthru
      _
    // Predicated region
    $region10: #{imitation_model_forward.1} parent=1 // pred_check
      _
    $region11: #{imitation_model_forward.1} parent=1 // pred_check_branch
      %20 = sbr.rel (0) target = $region13
    $region12: #{imitation_model_forward.1} parent=1 // pred_region
      _
    $region13: #{imitation_model_forward.1} parent=1 // pred_fallthru
      _
    // Predicated region
    $region14: #{imitation_model_forward.1} parent=1 // pred_check
      _
    $region15: #{imitation_model_forward.1} parent=1 // pred_check_branch
      %22 = sbr.rel (0) target = $region17
    $region16: #{imitation_model_forward.1} parent=1 // pred_region
      _
    $region17: #{imitation_model_forward.1} parent=1 // pred_fallthru
      _
    // Predicated region
    $region18: #{imitation_model_forward.1} parent=1 // pred_check
      _
    $region19: #{imitation_model_forward.1} parent=1 // pred_check_branch
      %24 = sbr.rel (0) target = $region21
    $region20: #{imitation_model_forward.1} parent=1 // pred_region
      _
    $region21: #{imitation_model_forward.1} parent=1 // pred_fallthru
      _
    // Predicated region
    $region22: #{imitation_model_forward.1} parent=1 // pred_check
      _
    $region23: #{imitation_model_forward.1} parent=1 // pred_check_branch
      %26 = sbr.rel (0) target = $region25
    $region24: #{imitation_model_forward.1} parent=1 // pred_region
      %s28 = ssub.s32 2048, 2048
      %29 = vsyncadd [#allocation3], %s28
      %s30 = sshll.u32 [#allocation2], 4
      %s31 = int_to_ptr.vmem [resolvable:$true] %s30
      %36 = dma.hbm_to_vmem [thread:$0]  %s5, 2048, %s31, [#allocation3], 128, 128, 8
    $region25: #{imitation_model_forward.1} parent=1 // pred_fallthru
      _
    // Predicated region
    $region26: #{imitation_model_forward.1} parent=1 // pred_check
      _
    $region27: #{imitation_model_forward.1} parent=1 // pred_check_branch
      %38 = sbr.rel (0) target = $region29
    $region28: #{imitation_model_forward.1} parent=1 // pred_region
      _
    $region29: #{imitation_model_forward.1} parent=1 // pred_fallthru
      _
    // Predicated region
    $region30: #{imitation_model_forward.1} parent=1 // pred_check
      _
    $region31: #{imitation_model_forward.1} parent=1 // pred_check_branch
      %40 = sbr.rel (0) target = $region33
    $region32: #{imitation_model_forward.1} parent=1 // pred_region
      _
    $region33: #{imitation_model_forward.1} parent=1 // pred_fallthru
      _
    // Predicated region
    $region34: #{imitation_model_forward.1} parent=1 // pred_check
      _
    $region35: #{imitation_model_forward.1} parent=1 // pred_check_branch
      %42 = sbr.rel (0) target = $region37
    $region36: #{imitation_model_forward.1} parent=1 // pred_region
      _
    $region37: #{imitation_model_forward.1} parent=1 // pred_fallthru
      _
    // Predicated region
    $region38: #{imitation_model_forward.1} parent=1 // pred_check
      _
    $region39: #{imitation_model_forward.1} parent=1 // pred_check_branch
      %44 = sbr.rel (0) target = $region41
    $region40: #{imitation_model_forward.1} parent=1 // pred_region
      %45 = dma.done [#allocation3], 2048
    $region41: #{imitation_model_forward.1} parent=1 // pred_fallthru
      _
    %v46 = vld [vmem:[%s0] sm:$0xff]
    %v47 = vld [vmem:[%s0 + $0x8] sm:$0xff]
    %v48 = vld [vmem:[%s0 + $0x10] sm:$0xff]
    %v49 = vld [vmem:[%s0 + $0x18] sm:$0xff]
    %v50 = vld [vmem:[%s1] sm:$0x1f]
    %v51 = vld [vmem:[%s2] sm:$0x1]
    %v53 = vlaneseq
    %v54 = vshrl.u32 %v53, 7
    %v55 = vsub.s32 0, %v54
    %v56 = vrot.slane %v51, %v55
    %vm58 = vcmask 39936
    %v60 = vsel %vm58, %v46, 0
    %v63 = vsel %vm58, %v47, 0
    %v66 = vsel %vm58, %v48, 0
    %v69 = vsel %vm58, %v49, 0
    %vm71 = vcmask 1044480
    %v73 = vsel %vm71, %v50, 0
    %75 = vmatprep.subr.mxu0 0.0
    %76 = vmatpush1.msra.mxu0 %v73
    %77 = vmatprep.subr.mxu0 0.0
    %78 = vmatpush1.msra.mxu0 0.0
    %79 = vmatprep.subr.mxu0 0.0
    %80 = vmatpush1.msra.mxu0 0.0
    %81 = vmatprep.subr.mxu0 0.0
    %82 = vmatpush1.msra.mxu0 0.0
    %83 = vmatprep.subr.mxu0 0.0
    %84 = vmatpush1.msra.mxu0 0.0
    %85 = vmatprep.subr.mxu0 0.0
    %86 = vmatpush1.msra.mxu0 0.0
    %87 = vmatprep.subr.mxu0 0.0
    %88 = vmatpush1.msra.mxu0 0.0
    %89 = vmatprep.subr.mxu0 0.0
    %90 = vmatpush1.msra.mxu0 0.0
    %91 = vmatprep.subr.mxu0 0.0
    %92 = vmatpush1.msra.mxu0 0.0
    %93 = vmatprep.subr.mxu0 0.0
    %94 = vmatpush1.msra.mxu0 0.0
    %95 = vmatprep.subr.mxu0 0.0
    %96 = vmatpush1.msra.mxu0 0.0
    %97 = vmatprep.subr.mxu0 0.0
    %98 = vmatpush1.msra.mxu0 0.0
    %99 = vmatprep.subr.mxu0 0.0
    %100 = vmatpush1.msra.mxu0 0.0
    %101 = vmatprep.subr.mxu0 0.0
    %102 = vmatpush1.msra.mxu0 0.0
    %103 = vmatprep.subr.mxu0 0.0
    %104 = vmatpush1.msra.mxu0 0.0
    %105 = vmatprep.subr.mxu0 0.0
    %106 = vmatpush1.msra.mxu0 0.0
    %107 = vmatprep.subr.mxu0 0.0
    %108 = vmatpush1.msra.mxu0 0.0
    %109 = vmatprep.subr.mxu0 0.0
    %110 = vmatpush1.msra.mxu0 0.0
    %111 = vmatprep.subr.mxu0 0.0
    %112 = vmatpush1.msra.mxu0 0.0
    %113 = vmatprep.subr.mxu0 0.0
    %114 = vmatpush1.msra.mxu0 0.0
    %115 = vmatprep.subr.mxu0 0.0
    %116 = vmatpush1.msra.mxu0 0.0
    %117 = vmatprep.subr.mxu0 0.0
    %118 = vmatpush1.msra.mxu0 0.0
    %119 = vmatprep.subr.mxu0 0.0
    %120 = vmatpush1.msra.mxu0 0.0
    %121 = vmatprep.subr.mxu0 0.0
    %122 = vmatpush1.msra.mxu0 0.0
    %123 = vmatprep.subr.mxu0 0.0
    %124 = vmatpush1.msra.mxu0 0.0
    %125 = vmatprep.subr.mxu0 0.0
    %126 = vmatpush1.msra.mxu0 0.0
    %127 = vmatprep.subr.mxu0 0.0
    %128 = vmatpush1.msra.mxu0 0.0
    %129 = vmatprep.subr.mxu0 0.0
    %130 = vmatpush1.msra.mxu0 0.0
    %131 = vmatprep.subr.mxu0 0.0
    %132 = vmatpush1.msra.mxu0 0.0
    %133 = vmatprep.subr.mxu0 0.0
    %134 = vmatpush1.msra.mxu0 0.0
    %135 = vmatprep.subr.mxu0 0.0
    %136 = vmatpush1.msra.mxu0 0.0
    %137 = vmatprep.subr.mxu0 0.0
    %138 = vmatpush1.msra.mxu0 0.0
    %139 = vmatprep.mubr.f32.mxu0 0.0
    %140 = vmatmul.mubr.f32.gmra.mrb[0].mxu0 %v60
    %v141 = vpop.f32.mrb[0].mxu0
    %v142 = vadd.f32 %v56, %v141
    %v143 = vpop.f32.mrb[0].mxu0
    %144 = vmatprep.mubr.f32.mxu0 0.0
    %145 = vmatmul.mubr.f32.gmra.mrb[0].mxu0 %v63
    %v146 = vpop.f32.mrb[0].mxu0
    %v147 = vadd.f32 %v56, %v146
    %v148 = vpop.f32.mrb[0].mxu0
    %149 = vmatprep.mubr.f32.mxu0 0.0
    %150 = vmatmul.mubr.f32.gmra.mrb[0].mxu0 %v66
    %v151 = vpop.f32.mrb[0].mxu0
    %v152 = vadd.f32 %v56, %v151
    %v153 = vpop.f32.mrb[0].mxu0
    %154 = vmatprep.mubr.f32.mxu0 0.0
    %155 = vmatmul.mubr.f32.gmra.mrb[0].mxu0 %v69
    %v156 = vpop.f32.mrb[0].mxu0
    %v157 = vadd.f32 %v56, %v156
    %v158 = vpop.f32.mrb[0].mxu0
    %159 = vdwg.mxu0
    %v160 = vmax.f32 %v142, 0.0
    %v161 = vmax.f32 %v147, 0.0
    %v162 = vmax.f32 %v152, 0.0
    %v163 = vmax.f32 %v157, 0.0
    %v164 = vld [vmem:[%s3] sm:$0xff]
    %v165 = vld [vmem:[%s3 + $0x8] sm:$0xff]
    %v166 = vld [vmem:[%s3 + $0x10] sm:$0xff]
    %v167 = vld [vmem:[%s3 + $0x18] sm:$0xff]
    %v168 = vld [vmem:[%s3 + $0x20] sm:$0xff]
    %v169 = vld [vmem:[%s3 + $0x28] sm:$0xff]
    %v170 = vld [vmem:[%s3 + $0x30] sm:$0xff]
    %v171 = vld [vmem:[%s3 + $0x38] sm:$0xff]
    %v172 = vld [vmem:[%s3 + $0x40] sm:$0xff]
    %v173 = vld [vmem:[%s3 + $0x48] sm:$0xff]
    %v174 = vld [vmem:[%s3 + $0x50] sm:$0xff]
    %v175 = vld [vmem:[%s3 + $0x58] sm:$0xff]
    %v176 = vld [vmem:[%s3 + $0x60] sm:$0xff]
    %v177 = vld [vmem:[%s3 + $0x68] sm:$0xff]
    %v178 = vld [vmem:[%s3 + $0x70] sm:$0xff]
    %v179 = vld [vmem:[%s3 + $0x78] sm:$0xff]
    %v180 = vld [vmem:[%s4] sm:$0x1]
    %v182 = vlaneseq
    %v183 = vshrl.u32 %v182, 7
    %v184 = vsub.s32 0, %v183
    %v185 = vrot.slane %v180, %v184
    %187 = vmatprep.subr.mxu0 0.0
    %188 = vmatpush1.msra.mxu0 %v164
    %189 = vmatprep.subr.mxu0 0.0
    %190 = vmatpush1.msra.mxu0 %v165
    %191 = vmatprep.subr.mxu0 0.0
    %192 = vmatpush1.msra.mxu0 %v166
    %193 = vmatprep.subr.mxu0 0.0
    %194 = vmatpush1.msra.mxu0 %v167
    %195 = vmatprep.subr.mxu0 0.0
    %196 = vmatpush1.msra.mxu0 %v168
    %197 = vmatprep.subr.mxu0 0.0
    %198 = vmatpush1.msra.mxu0 %v169
    %199 = vmatprep.subr.mxu0 0.0
    %200 = vmatpush1.msra.mxu0 %v170
    %201 = vmatprep.subr.mxu0 0.0
    %202 = vmatpush1.msra.mxu0 %v171
    %203 = vmatprep.subr.mxu0 0.0
    %204 = vmatpush1.msra.mxu0 %v172
    %205 = vmatprep.subr.mxu0 0.0
    %206 = vmatpush1.msra.mxu0 %v173
    %207 = vmatprep.subr.mxu0 0.0
    %208 = vmatpush1.msra.mxu0 %v174
    %209 = vmatprep.subr.mxu0 0.0
    %210 = vmatpush1.msra.mxu0 %v175
    %211 = vmatprep.subr.mxu0 0.0
    %212 = vmatpush1.msra.mxu0 %v176
    %213 = vmatprep.subr.mxu0 0.0
    %214 = vmatpush1.msra.mxu0 %v177
    %215 = vmatprep.subr.mxu0 0.0
    %216 = vmatpush1.msra.mxu0 %v178
    %217 = vmatprep.subr.mxu0 0.0
    %218 = vmatpush1.msra.mxu0 %v179
    %219 = vmatprep.subr.mxu0 0.0
    %220 = vmatpush1.msra.mxu0 0.0
    %221 = vmatprep.subr.mxu0 0.0
    %222 = vmatpush1.msra.mxu0 0.0
    %223 = vmatprep.subr.mxu0 0.0
    %224 = vmatpush1.msra.mxu0 0.0
    %225 = vmatprep.subr.mxu0 0.0
    %226 = vmatpush1.msra.mxu0 0.0
    %227 = vmatprep.subr.mxu0 0.0
    %228 = vmatpush1.msra.mxu0 0.0
    %229 = vmatprep.subr.mxu0 0.0
    %230 = vmatpush1.msra.mxu0 0.0
    %231 = vmatprep.subr.mxu0 0.0
    %232 = vmatpush1.msra.mxu0 0.0
    %233 = vmatprep.subr.mxu0 0.0
    %234 = vmatpush1.msra.mxu0 0.0
    %235 = vmatprep.subr.mxu0 0.0
    %236 = vmatpush1.msra.mxu0 0.0
    %237 = vmatprep.subr.mxu0 0.0
    %238 = vmatpush1.msra.mxu0 0.0
    %239 = vmatprep.subr.mxu0 0.0
    %240 = vmatpush1.msra.mxu0 0.0
    %241 = vmatprep.subr.mxu0 0.0
    %242 = vmatpush1.msra.mxu0 0.0
    %243 = vmatprep.subr.mxu0 0.0
    %244 = vmatpush1.msra.mxu0 0.0
    %245 = vmatprep.subr.mxu0 0.0
    %246 = vmatpush1.msra.mxu0 0.0
    %247 = vmatprep.subr.mxu0 0.0
    %248 = vmatpush1.msra.mxu0 0.0
    %249 = vmatprep.subr.mxu0 0.0
    %250 = vmatpush1.msra.mxu0 0.0
    %251 = vmatprep.mubr.f32.mxu0 0.0
    %252 = vmatmul.mubr.f32.gmra.mrb[0].mxu0 %v160
    %v253 = vpop.f32.mrb[0].mxu0
    %v254 = vadd.f32 %v185, %v253
    %v255 = vpop.f32.mrb[0].mxu0
    %256 = vmatprep.mubr.f32.mxu0 0.0
    %257 = vmatmul.mubr.f32.gmra.mrb[0].mxu0 %v161
    %v258 = vpop.f32.mrb[0].mxu0
    %v259 = vadd.f32 %v185, %v258
    %v260 = vpop.f32.mrb[0].mxu0
    %261 = vmatprep.mubr.f32.mxu0 0.0
    %262 = vmatmul.mubr.f32.gmra.mrb[0].mxu0 %v162
    %v263 = vpop.f32.mrb[0].mxu0
    %v264 = vadd.f32 %v185, %v263
    %v265 = vpop.f32.mrb[0].mxu0
    %266 = vmatprep.mubr.f32.mxu0 0.0
    %267 = vmatmul.mubr.f32.gmra.mrb[0].mxu0 %v163
    %v268 = vpop.f32.mrb[0].mxu0
    %v269 = vadd.f32 %v185, %v268
    %v270 = vpop.f32.mrb[0].mxu0
    %271 = vdwg.mxu0
    %v272 = vmax.f32 %v254, 0.0
    %v273 = vmax.f32 %v259, 0.0
    %v274 = vmax.f32 %v264, 0.0
    %v275 = vmax.f32 %v269, 0.0
    %v276 = vld [vmem:[#allocation2] sm:$0xff]
    %v277 = vld [vmem:[#allocation2 + $0x8] sm:$0xff]
    %v278 = vld [vmem:[#allocation2 + $0x10] sm:$0xff]
    %v279 = vld [vmem:[#allocation2 + $0x18] sm:$0xff]
    %v280 = vld [vmem:[#allocation2 + $0x20] sm:$0xff]
    %v281 = vld [vmem:[#allocation2 + $0x28] sm:$0xff]
    %v282 = vld [vmem:[#allocation2 + $0x30] sm:$0xff]
    %v283 = vld [vmem:[#allocation2 + $0x38] sm:$0xff]
    %v284 = vld [vmem:[#allocation2 + $0x40] sm:$0xff]
    %v285 = vld [vmem:[#allocation2 + $0x48] sm:$0xff]
    %v286 = vld [vmem:[#allocation2 + $0x50] sm:$0xff]
    %v287 = vld [vmem:[#allocation2 + $0x58] sm:$0xff]
    %v288 = vld [vmem:[#allocation2 + $0x60] sm:$0xff]
    %v289 = vld [vmem:[#allocation2 + $0x68] sm:$0xff]
    %v290 = vld [vmem:[#allocation2 + $0x70] sm:$0xff]
    %v291 = vld [vmem:[#allocation2 + $0x78] sm:$0xff]
    %v292 = vld [vmem:[%s6] sm:$0x1]
    %v294 = vlaneseq
    %v295 = vshrl.u32 %v294, 7
    %v296 = vsub.s32 0, %v295
    %v297 = vrot.slane %v292, %v296
    %299 = vmatprep.subr.mxu0 0.0
    %300 = vmatpush1.msra.mxu0 %v276
    %301 = vmatprep.subr.mxu0 0.0
    %302 = vmatpush1.msra.mxu0 %v277
    %303 = vmatprep.subr.mxu0 0.0
    %304 = vmatpush1.msra.mxu0 %v278
    %305 = vmatprep.subr.mxu0 0.0
    %306 = vmatpush1.msra.mxu0 %v279
    %307 = vmatprep.subr.mxu0 0.0
    %308 = vmatpush1.msra.mxu0 %v280
    %309 = vmatprep.subr.mxu0 0.0
    %310 = vmatpush1.msra.mxu0 %v281
    %311 = vmatprep.subr.mxu0 0.0
    %312 = vmatpush1.msra.mxu0 %v282
    %313 = vmatprep.subr.mxu0 0.0
    %314 = vmatpush1.msra.mxu0 %v283
    %315 = vmatprep.subr.mxu0 0.0
    %316 = vmatpush1.msra.mxu0 %v284
    %317 = vmatprep.subr.mxu0 0.0
    %318 = vmatpush1.msra.mxu0 %v285
    %319 = vmatprep.subr.mxu0 0.0
    %320 = vmatpush1.msra.mxu0 %v286
    %321 = vmatprep.subr.mxu0 0.0
    %322 = vmatpush1.msra.mxu0 %v287
    %323 = vmatprep.subr.mxu0 0.0
    %324 = vmatpush1.msra.mxu0 %v288
    %325 = vmatprep.subr.mxu0 0.0
    %326 = vmatpush1.msra.mxu0 %v289
    %327 = vmatprep.subr.mxu0 0.0
    %328 = vmatpush1.msra.mxu0 %v290
    %329 = vmatprep.subr.mxu0 0.0
    %330 = vmatpush1.msra.mxu0 %v291
    %331 = vmatprep.subr.mxu0 0.0
    %332 = vmatpush1.msra.mxu0 0.0
    %333 = vmatprep.subr.mxu0 0.0
    %334 = vmatpush1.msra.mxu0 0.0
    %335 = vmatprep.subr.mxu0 0.0
    %336 = vmatpush1.msra.mxu0 0.0
    %337 = vmatprep.subr.mxu0 0.0
    %338 = vmatpush1.msra.mxu0 0.0
    %339 = vmatprep.subr.mxu0 0.0
    %340 = vmatpush1.msra.mxu0 0.0
    %341 = vmatprep.subr.mxu0 0.0
    %342 = vmatpush1.msra.mxu0 0.0
    %343 = vmatprep.subr.mxu0 0.0
    %344 = vmatpush1.msra.mxu0 0.0
    %345 = vmatprep.subr.mxu0 0.0
    %346 = vmatpush1.msra.mxu0 0.0
    %347 = vmatprep.subr.mxu0 0.0
    %348 = vmatpush1.msra.mxu0 0.0
    %349 = vmatprep.subr.mxu0 0.0
    %350 = vmatpush1.msra.mxu0 0.0
    %351 = vmatprep.subr.mxu0 0.0
    %352 = vmatpush1.msra.mxu0 0.0
    %353 = vmatprep.subr.mxu0 0.0
    %354 = vmatpush1.msra.mxu0 0.0
    %355 = vmatprep.subr.mxu0 0.0
    %356 = vmatpush1.msra.mxu0 0.0
    %357 = vmatprep.subr.mxu0 0.0
    %358 = vmatpush1.msra.mxu0 0.0
    %359 = vmatprep.subr.mxu0 0.0
    %360 = vmatpush1.msra.mxu0 0.0
    %361 = vmatprep.subr.mxu0 0.0
    %362 = vmatpush1.msra.mxu0 0.0
    %363 = vmatprep.mubr.f32.mxu0 0.0
    %364 = vmatmul.mubr.f32.gmra.mrb[0].mxu0 %v272
    %v365 = vpop.f32.mrb[0].mxu0
    %v366 = vadd.f32 %v297, %v365
    %v367 = vpop.f32.mrb[0].mxu0
    %368 = vmatprep.mubr.f32.mxu0 0.0
    %369 = vmatmul.mubr.f32.gmra.mrb[0].mxu0 %v273
    %v370 = vpop.f32.mrb[0].mxu0
    %v371 = vadd.f32 %v297, %v370
    %v372 = vpop.f32.mrb[0].mxu0
    %373 = vmatprep.mubr.f32.mxu0 0.0
    %374 = vmatmul.mubr.f32.gmra.mrb[0].mxu0 %v274
    %v375 = vpop.f32.mrb[0].mxu0
    %v376 = vadd.f32 %v297, %v375
    %v377 = vpop.f32.mrb[0].mxu0
    %378 = vmatprep.mubr.f32.mxu0 0.0
    %379 = vmatmul.mubr.f32.gmra.mrb[0].mxu0 %v275
    %v380 = vpop.f32.mrb[0].mxu0
    %v381 = vadd.f32 %v297, %v380
    %v382 = vpop.f32.mrb[0].mxu0
    %383 = vdwg.mxu0
    %v384 = vmax.f32 %v366, 0.0
    %v385 = vmax.f32 %v371, 0.0
    %v386 = vmax.f32 %v376, 0.0
    %v387 = vmax.f32 %v381, 0.0
    %v388 = vld [vmem:[%s7] sm:$0xff]
    %v389 = vld [vmem:[%s7 + $0x8] sm:$0xff]
    %v390 = vld [vmem:[%s7 + $0x10] sm:$0xff]
    %v391 = vld [vmem:[%s7 + $0x18] sm:$0xff]
    %v392 = vld [vmem:[%s7 + $0x20] sm:$0xff]
    %v393 = vld [vmem:[%s7 + $0x28] sm:$0xff]
    %v394 = vld [vmem:[%s7 + $0x30] sm:$0xff]
    %v395 = vld [vmem:[%s7 + $0x38] sm:$0xff]
    %v396 = vld [vmem:[%s7 + $0x40] sm:$0xff]
    %v397 = vld [vmem:[%s7 + $0x48] sm:$0xff]
    %v398 = vld [vmem:[%s7 + $0x50] sm:$0xff]
    %v399 = vld [vmem:[%s7 + $0x58] sm:$0xff]
    %v400 = vld [vmem:[%s7 + $0x60] sm:$0xff]
    %v401 = vld [vmem:[%s7 + $0x68] sm:$0xff]
    %v402 = vld [vmem:[%s7 + $0x70] sm:$0xff]
    %v403 = vld [vmem:[%s7 + $0x78] sm:$0xff]
    %v404 = vld [vmem:[%s8] sm:$0x1]
    %v406 = vlaneseq
    %v407 = vshrl.u32 %v406, 7
    %v408 = vsub.s32 0, %v407
    %v409 = vrot.slane %v404, %v408
    %411 = vmatprep.subr.mxu0 0.0
    %412 = vmatpush1.msra.mxu0 %v388
    %413 = vmatprep.subr.mxu0 0.0
    %414 = vmatpush1.msra.mxu0 %v389
    %415 = vmatprep.subr.mxu0 0.0
    %416 = vmatpush1.msra.mxu0 %v390
    %417 = vmatprep.subr.mxu0 0.0
    %418 = vmatpush1.msra.mxu0 %v391
    %419 = vmatprep.subr.mxu0 0.0
    %420 = vmatpush1.msra.mxu0 %v392
    %421 = vmatprep.subr.mxu0 0.0
    %422 = vmatpush1.msra.mxu0 %v393
    %423 = vmatprep.subr.mxu0 0.0
    %424 = vmatpush1.msra.mxu0 %v394
    %425 = vmatprep.subr.mxu0 0.0
    %426 = vmatpush1.msra.mxu0 %v395
    %427 = vmatprep.subr.mxu0 0.0
    %428 = vmatpush1.msra.mxu0 %v396
    %429 = vmatprep.subr.mxu0 0.0
    %430 = vmatpush1.msra.mxu0 %v397
    %431 = vmatprep.subr.mxu0 0.0
    %432 = vmatpush1.msra.mxu0 %v398
    %433 = vmatprep.subr.mxu0 0.0
    %434 = vmatpush1.msra.mxu0 %v399
    %435 = vmatprep.subr.mxu0 0.0
    %436 = vmatpush1.msra.mxu0 %v400
    %437 = vmatprep.subr.mxu0 0.0
    %438 = vmatpush1.msra.mxu0 %v401
    %439 = vmatprep.subr.mxu0 0.0
    %440 = vmatpush1.msra.mxu0 %v402
    %441 = vmatprep.subr.mxu0 0.0
    %442 = vmatpush1.msra.mxu0 %v403
    %443 = vmatprep.subr.mxu0 0.0
    %444 = vmatpush1.msra.mxu0 0.0
    %445 = vmatprep.subr.mxu0 0.0
    %446 = vmatpush1.msra.mxu0 0.0
    %447 = vmatprep.subr.mxu0 0.0
    %448 = vmatpush1.msra.mxu0 0.0
    %449 = vmatprep.subr.mxu0 0.0
    %450 = vmatpush1.msra.mxu0 0.0
    %451 = vmatprep.subr.mxu0 0.0
    %452 = vmatpush1.msra.mxu0 0.0
    %453 = vmatprep.subr.mxu0 0.0
    %454 = vmatpush1.msra.mxu0 0.0
    %455 = vmatprep.subr.mxu0 0.0
    %456 = vmatpush1.msra.mxu0 0.0
    %457 = vmatprep.subr.mxu0 0.0
    %458 = vmatpush1.msra.mxu0 0.0
    %459 = vmatprep.subr.mxu0 0.0
    %460 = vmatpush1.msra.mxu0 0.0
    %461 = vmatprep.subr.mxu0 0.0
    %462 = vmatpush1.msra.mxu0 0.0
    %463 = vmatprep.subr.mxu0 0.0
    %464 = vmatpush1.msra.mxu0 0.0
    %465 = vmatprep.subr.mxu0 0.0
    %466 = vmatpush1.msra.mxu0 0.0
    %467 = vmatprep.subr.mxu0 0.0
    %468 = vmatpush1.msra.mxu0 0.0
    %469 = vmatprep.subr.mxu0 0.0
    %470 = vmatpush1.msra.mxu0 0.0
    %471 = vmatprep.subr.mxu0 0.0
    %472 = vmatpush1.msra.mxu0 0.0
    %473 = vmatprep.subr.mxu0 0.0
    %474 = vmatpush1.msra.mxu0 0.0
    %475 = vmatprep.mubr.f32.mxu0 0.0
    %476 = vmatmul.mubr.f32.gmra.mrb[0].mxu0 %v384
    %v477 = vpop.f32.mrb[0].mxu0
    %v478 = vadd.f32 %v409, %v477
    %v479 = vpop.f32.mrb[0].mxu0
    %480 = vmatprep.mubr.f32.mxu0 0.0
    %481 = vmatmul.mubr.f32.gmra.mrb[0].mxu0 %v385
    %v482 = vpop.f32.mrb[0].mxu0
    %v483 = vadd.f32 %v409, %v482
    %v484 = vpop.f32.mrb[0].mxu0
    %485 = vmatprep.mubr.f32.mxu0 0.0
    %486 = vmatmul.mubr.f32.gmra.mrb[0].mxu0 %v386
    %v487 = vpop.f32.mrb[0].mxu0
    %v488 = vadd.f32 %v409, %v487
    %v489 = vpop.f32.mrb[0].mxu0
    %490 = vmatprep.mubr.f32.mxu0 0.0
    %491 = vmatmul.mubr.f32.gmra.mrb[0].mxu0 %v387
    %v492 = vpop.f32.mrb[0].mxu0
    %v493 = vadd.f32 %v409, %v492
    %v494 = vpop.f32.mrb[0].mxu0
    %495 = vdwg.mxu0
    %496 = vst.msk [vmem:[%s9] sm:$0xff] %vm58, %v478
    %497 = vst.msk [vmem:[%s9 + $0x8] sm:$0xff] %vm58, %v483
    %498 = vst.msk [vmem:[%s9 + $0x10] sm:$0xff] %vm58, %v488
    %499 = vst.msk [vmem:[%s9 + $0x18] sm:$0xff] %vm58, %v493
    // Predicated region
    $region42: #{imitation_model_forward.1} parent=1 // pred_check
      _
    $region43: #{imitation_model_forward.1} parent=1 // pred_check_branch
      %501 = sbr.rel (0) target = $region45
    $region44: #{imitation_model_forward.1} parent=1 // pred_region
      _
    $region45: #{imitation_model_forward.1} parent=1 // pred_fallthru
      _
    // Predicated region
    $region46: #{imitation_model_forward.1} parent=1 // pred_check
      _
    $region47: #{imitation_model_forward.1} parent=1 // pred_check_branch
      %503 = sbr.rel (0) target = $region49
    $region48: #{imitation_model_forward.1} parent=1 // pred_region
      _
    $region49: #{imitation_model_forward.1} parent=1 // pred_fallthru
      _
    %504 = vsyncpa [#allocation3], 1

</llo_original>
